<compile_context>
chip_gen: v7x
topology: tpu7x:2x2x1
jax: 0.10.0
libtpu: 0.0.40
codegen_flags: <defaults>
</compile_context>

<pallas_src>
import functools

import jax
import jax.numpy as jnp
from jax.experimental import pallas as pl
from jax.experimental.pallas import tpu as pltpu


def _round_up(v: int, m: int) -> int:
    return (v + m - 1) // m * m


def _gemv_kernel(x_ref, w_ref, o_ref):
    # Single-K-step path: the whole feature axis is resident in the x block.
    # VPU multiply (lane-wise w broadcast over sublanes) + lane-axis reduce.
    x = x_ref[...].astype(jnp.float32)
    w = w_ref[...].astype(jnp.float32)
    o_ref[...] = jnp.sum(x * w, axis=-1, keepdims=True).astype(o_ref.dtype)


def _gemv_kernel_ktiled(x_ref, w_ref, o_ref, acc_ref, *, d_total, tk):
    # Large-D fallback: feature axis split over grid axis 1 ("arbitrary").
    k = pl.program_id(1)

    @pl.when(k == 0)
    def _init():
        acc_ref[...] = jnp.zeros_like(acc_ref)

    x = x_ref[...].astype(jnp.float32)
    w = w_ref[...].astype(jnp.float32)
    # The last K tile may be ragged; its out-of-bounds region holds
    # unspecified VMEM bits (possibly NaN/Inf), so mask the *product* instead
    # of padding x / w in HBM.  The vsel cost is hidden under the x DMA.
    col = jax.lax.broadcasted_iota(jnp.int32, x.shape, 1) + k * tk
    prod = jnp.where(col < d_total, x * w, 0.0)
    acc_ref[...] += jnp.sum(prod, axis=-1, keepdims=True)

    @pl.when(k == pl.num_programs(1) - 1)
    def _finalize():
        o_ref[...] = acc_ref[...].astype(o_ref.dtype)


def _choose_tiles(n: int, d: int, block_bytes: int):
    """Pick (tn, tk, kt) so the f32 x block is ~block_bytes."""
    # Prefer a single K step (tk == d, full-extent last block dim -> no
    # padding anywhere) whenever an >= 8-row block fits the budget.
    if 8 * d * 4 <= block_bytes:
        tn = max(8, (block_bytes // (d * 4)) // 8 * 8)
        tn = min(tn, 1024, _round_up(n, 8))
        # Megacore: keep >= 2 batch tiles when the batch allows it so the
        # "parallel" grid axis actually engages both TensorCores (v7x).
        if pl.cdiv(n, tn) == 1 and n > 8:
            tn = max(8, _round_up(pl.cdiv(n, 2), 8))
        return tn, d, 1
    # Very large D: lane-aligned feature tiles + f32 accumulator.
    tn = min(256, _round_up(n, 8))
    tk = max(128, min(_round_up(d, 128), (block_bytes // (tn * 4)) // 128 * 128))
    return tn, tk, pl.cdiv(d, tk)


def logistic_regression_forward(x, w, *, block_bytes=8 << 20):
    """y = x @ w, streaming x from HBM (HBM-read-bound GEMV)."""
    n, d = x.shape
    assert w.shape == (d, 1)
    out_dtype = x.dtype
    # Lane-major weight layout; tiny (d * 4 bytes) wrapper-side reshape.
    w_row = w.reshape(1, d)

    tn, tk, kt = _choose_tiles(n, d, block_bytes)

    cost = pl.CostEstimate(
        flops=2 * n * d,
        transcendentals=0,
        bytes_accessed=(n * d + d + n) * jnp.dtype(out_dtype).itemsize,
    )

    if kt == 1:
        # Common path: single K step, w DMA'd once (constant block index),
        # no accumulator scratch, no padding, partial last batch block.
        return pl.pallas_call(
            _gemv_kernel,
            out_shape=jax.ShapeDtypeStruct((n, 1), out_dtype),
            grid_spec=pltpu.PrefetchScalarGridSpec(
                num_scalar_prefetch=0,
                grid=(pl.cdiv(n, tn),),
                in_specs=[
                    pl.BlockSpec((tn, d), lambda i: (i, 0)),   # x row block
                    pl.BlockSpec((1, d), lambda i: (0, 0)),    # resident w
                ],
                out_specs=pl.BlockSpec((tn, 1), lambda i: (i, 0)),
            ),
            compiler_params=pltpu.CompilerParams(
                dimension_semantics=("parallel",),
                vmem_limit_bytes=48 << 20,
            ),
            cost_estimate=cost,
        )(x, w_row)

    # K-tiled fallback (huge D).
    kernel = functools.partial(_gemv_kernel_ktiled, d_total=d, tk=tk)
    return pl.pallas_call(
        kernel,
        out_shape=jax.ShapeDtypeStruct((n, 1), out_dtype),
        grid_spec=pltpu.PrefetchScalarGridSpec(
            num_scalar_prefetch=0,
            grid=(pl.cdiv(n, tn), kt),
            in_specs=[
                pl.BlockSpec((tn, tk), lambda i, k: (i, k)),   # x row/K tile
                pl.BlockSpec((1, tk), lambda i, k: (0, k)),    # w K tile (tiny)
            ],
            out_specs=pl.BlockSpec((tn, 1), lambda i, k: (i, 0)),
            scratch_shapes=[pltpu.VMEM((tn, 1), jnp.float32)],
        ),
        compiler_params=pltpu.CompilerParams(
            dimension_semantics=("parallel", "arbitrary"),
            vmem_limit_bytes=48 << 20,
        ),
        cost_estimate=cost,
    )(x, w_row)


if __name__ == "__main__":
    key = jax.random.PRNGKey(0)
    kx, kw = jax.random.split(key)

    # Module-consistent small case: batch n=8, input_dim d=32.
    n, d = 8, 32
    x = jax.random.normal(kx, (n, d), dtype=jnp.float32)
    w = jax.random.normal(kw, (d, 1), dtype=jnp.float32)  # torch.randn-like init
    y = logistic_regression_forward(x, w)
    jax.block_until_ready(y)
    assert y.shape == (n, 1)
    assert jnp.allclose(y, x @ w, atol=1e-5, rtol=1e-5)

    # Multi-row-tile single-K path: ragged last batch block, 2 "parallel"
    # tiles, no padding anywhere.  Integer-valued inputs make the comparison
    # exact regardless of accumulation order.
    n2, d2 = 1030, 1200
    kx2, kw2 = jax.random.split(jax.random.PRNGKey(1))
    x2 = jax.random.randint(kx2, (n2, d2), -3, 4).astype(jnp.float32)
    w2 = jax.random.randint(kw2, (d2, 1), -3, 4).astype(jnp.float32)
    y2 = logistic_regression_forward(x2, w2)
    jax.block_until_ready(y2)
    assert y2.shape == (n2, 1)
    assert jnp.allclose(y2, x2 @ w2, atol=1e-4, rtol=1e-4)

    # Force the K-tiled fallback with a tiny block budget to exercise the
    # ragged last-K-tile masking and the accumulator init/finalize path.
    y3 = logistic_regression_forward(x2, w2, block_bytes=1 << 15)
    jax.block_until_ready(y3)
    assert jnp.allclose(y3, x2 @ w2, atol=1e-4, rtol=1e-4)

    print("KERNEL_OK")
</pallas_src>

<mosaic_0001>
module attributes {stable_mosaic.version = 11 : i64} {
  func.func @_gemv_kernel(%arg0: i32, %arg1: memref<8x32xf32, #tpu.memory_space<vmem>>, %arg2: memref<1x32xf32, #tpu.memory_space<vmem>>, %arg3: memref<8x1xf32, #tpu.memory_space<vmem>>) attributes {dimension_semantics = [#tpu.dimension_semantics<parallel>], iteration_bounds = array<i64: 1>, scalar_prefetch = 0 : i64, scratch_operands = 0 : i64, tpu.core_type = #tpu.core_type<tc>, window_params = [{transform_indices = @transform_0, window_bounds = array<i64: 8, 32>}, {pipeline_mode = #tpu.pipeline_mode<synchronous>, transform_indices = @transform_1, window_bounds = array<i64: 1, 32>}, {transform_indices = @transform_2, window_bounds = array<i64: 8, 1>}]} {
    %c0 = arith.constant 0 : index
    %c0_0 = arith.constant 0 : index
    %0 = vector.load %arg1[%c0, %c0_0] : memref<8x32xf32, #tpu.memory_space<vmem>>, vector<8x32xf32>
    %c0_1 = arith.constant 0 : index
    %c0_2 = arith.constant 0 : index
    %1 = vector.load %arg2[%c0_1, %c0_2] : memref<1x32xf32, #tpu.memory_space<vmem>>, vector<1x32xf32>
    %2 = vector.broadcast %1 : vector<1x32xf32> to vector<8x32xf32>
    %3 = arith.mulf %0, %2 : vector<8x32xf32>
    %cst = arith.constant dense<0.000000e+00> : vector<8xf32>
    %4 = vector.multi_reduction <add>, %3, %cst [1] : vector<8x32xf32> to vector<8xf32>
    %5 = vector.shape_cast %4 : vector<8xf32> to vector<8x1xf32>
    %c0_3 = arith.constant 0 : index
    %c0_4 = arith.constant 0 : index
    %6 = vector.load %arg3[%c0_3, %c0_4] : memref<8x1xf32, #tpu.memory_space<vmem>>, vector<8x1xf32>
    tpu.vector_store %arg3[%c0_3, %c0_4], %5 {strides = array<i32>} : memref<8x1xf32, #tpu.memory_space<vmem>>, vector<8x1xf32>,
    return
  }
  func.func @transform_0(%arg0: i32) -> (i32, i32) {
    %c0_i32 = arith.constant 0 : i32
    %c0_i32_0 = arith.constant 0 : i32
    return %arg0, %c0_i32 : i32, i32
  }
  func.func @transform_1(%arg0: i32) -> (i32, i32) {
    %c0_i32 = arith.constant 0 : i32
    %c0_i32_0 = arith.constant 0 : i32
    %c0_i32_1 = arith.constant 0 : i32
    return %c0_i32, %c0_i32_0 : i32, i32
  }
  func.func @transform_2(%arg0: i32) -> (i32, i32) {
    %c0_i32 = arith.constant 0 : i32
    %c0_i32_0 = arith.constant 0 : i32
    return %arg0, %c0_i32 : i32, i32
  }
}

</mosaic_0001>

<llo_original>
// kernel: tpu_custom_call.1
$region0: #{tpu_custom_call.1}
  #allocation0 [shape = 'u32[]', space=smem, size = 0x4, offset = 0x4, fixed_abs, tag = 'smem constant byte address 0x4 - core index']
  #allocation1 [shape = 'u32[144,128]{1,0:T(1,128)}', space=vmem, size = 0x12000, scoped, tag = 'internal scratch']
  %s0 = inlined_call_operand.hbm [shape: f32[8,32], index: 0, kind: input, shape index: {}]
  %s1 = inlined_call_operand.vmem [shape: f32[1,32], index: 1, kind: input, shape index: {}]
  %s2 = inlined_call_operand.vmem [shape: f32[8,1], index: 2, kind: output, shape index: {}]
  %s3 = sld [smem:[#allocation0]]
  $region22: #{tpu_custom_call.1} parent=0
    _
  %s5 = ssub.s32 1, %s3
  %s6 = scalar_select 0, %s5, %s3
  $region1: #{tpu_custom_call.1} parent=0
    #allocation2 [shape = 'u8[4096]{0}', space=vmem, size = 0x1000, scoped, tag = 'input window, operand 0, single buffered']
    #allocation3 [shape = 's32[1]{0}', space=sflag, size = 0x4, scoped, tag = 'scoped memory for tpu_custom_call.1']
    %7 = vsyncpa [#allocation3], 0
    // Predicated region
    $region2: #{tpu_custom_call.1} parent=1 // pred_check
      _
    $region3: #{tpu_custom_call.1} parent=1 // pred_check_branch
      %9 = sbr.rel (0) target = $region5
    $region4: #{tpu_custom_call.1} parent=1 // pred_region
      %s11 = ssub.s32 128, 128
      %12 = vsyncadd [#allocation3], %s11
      %s14 = sshll.u32 [#allocation2], 4
      %s15 = int_to_ptr.vmem [resolvable:$true] %s14
      %17 = dma.hbm_to_vmem [thread:$0]  %s0, 128, %s15, [#allocation3]
    $region5: #{tpu_custom_call.1} parent=1 // pred_fallthru
      _
    // Predicated region
    $region6: #{tpu_custom_call.1} parent=1 // pred_check
      _
    $region7: #{tpu_custom_call.1} parent=1 // pred_check_branch
      %19 = sbr.rel (0) target = $region9
    $region8: #{tpu_custom_call.1} parent=1 // pred_region
      _
    $region9: #{tpu_custom_call.1} parent=1 // pred_fallthru
      _
    // Predicated region
    $region10: #{tpu_custom_call.1} parent=1 // pred_check
      _
    $region11: #{tpu_custom_call.1} parent=1 // pred_check_branch
      %21 = sbr.rel (0) target = $region13
    $region12: #{tpu_custom_call.1} parent=1 // pred_region
      %22 = dma.done [#allocation3], 128
    $region13: #{tpu_custom_call.1} parent=1 // pred_fallthru
      _
    %v23 = vld [vmem:[#allocation2] sm:$0xff]
    %v24 = vld [vmem:[%s1] sm:$0x1]
    %v26 = vlaneseq
    %v27 = vshrl.u32 %v26, 7
    %v28 = vsub.s32 0, %v27
    %v29 = vrot.slane %v24, %v28
    %v31 = vmul.f32 %v23, %v29
    %vm32 = vcmask 261120
    %v33 = vsel %vm32, %v31, 0.0
    %34 = vadd.xlane.f32.xlu0 %v33
    %v35 = vpop.xlane.xlu0 %34
    %vm36 = vcmask 7168
    %37 = vst.msk [vmem:[%s2] sm:$0xff] %vm36, %v35
    // Predicated region
    $region14: #{tpu_custom_call.1} parent=1 // pred_check
      _
    $region15: #{tpu_custom_call.1} parent=1 // pred_check_branch
      %39 = sbr.rel (0) target = $region17
    $region16: #{tpu_custom_call.1} parent=1 // pred_region
      _
    $region17: #{tpu_custom_call.1} parent=1 // pred_fallthru
      _
    // Predicated region
    $region18: #{tpu_custom_call.1} parent=1 // pred_check
      _
    $region19: #{tpu_custom_call.1} parent=1 // pred_check_branch
      %41 = sbr.rel (0) target = $region21
    $region20: #{tpu_custom_call.1} parent=1 // pred_region
      _
    $region21: #{tpu_custom_call.1} parent=1 // pred_fallthru
      _
    %42 = vsyncpa [#allocation3], 1

</llo_original>
